<compile_context>
chip_gen: v6e
topology: v6e:2x2x1
jax: 0.10.0
libtpu: 0.0.40
codegen_flags: <defaults>
</compile_context>

<pallas_src>
import jax
import jax.numpy as jnp
from jax.experimental import pallas as pl
from jax.experimental.pallas import tpu as pltpu


# --------------------------------------------------------------------------- #
# Kernel: one batch tile per grid step, BN-folded 3-layer MLP.
# --------------------------------------------------------------------------- #
def avila_kernel(x_ref, w1_ref, b1_ref, w2_ref, b2_ref, w3_ref, b3_ref, o_ref):
    # In-kernel cast of x (f32 in HBM) to the MXU dtype; hides under the DMA.
    x = x_ref[...].astype(w1_ref.dtype)
    # lin1 (bn1 pre-folded) + relu  -- MXU with f32 accumulation.
    h = jnp.dot(x, w1_ref[...], preferred_element_type=jnp.float32)
    h = jnp.maximum(h + b1_ref[...], 0.0)          # f32 bias add + relu
    # dropout -> identity in eval mode
    # lin2 (bn2 pre-folded) + relu
    h = jnp.dot(h.astype(w2_ref.dtype), w2_ref[...],
                preferred_element_type=jnp.float32)
    h = jnp.maximum(h + b2_ref[...], 0.0)          # f32 bias add + relu
    # dropout -> identity in eval mode
    # lin3 (bn3 pre-folded) -> logits.  Last layer kept in f32 (weights are
    # 128x12, negligible cost) to avoid bf16 logit / argmax drift.
    o = jnp.dot(h, w3_ref[...], preferred_element_type=jnp.float32)
    o_ref[...] = (o + b3_ref[...]).astype(o_ref.dtype)


# --------------------------------------------------------------------------- #
# JAX-side glue: BN folding, lane padding of hidden widths, batch tiling.
# --------------------------------------------------------------------------- #
def _round_up(n, m):
    return ((n + m - 1) // m) * m


def fold_bn_into_linear(gamma, beta, mean, var, W, c, eps=1e-5):
    """Eval-mode BN followed by Linear:  bn(h) @ W + c == h @ Wf + cf."""
    s = gamma / jnp.sqrt(var + eps)
    b = beta - mean * s
    return s[:, None] * W, b @ W + c


def _pad2d(a, rows, cols):
    return jnp.pad(a, ((0, rows - a.shape[0]), (0, cols - a.shape[1])))


def _pad1d(a, n):
    return jnp.pad(a, (0, n - a.shape[0]))


def avila_forward(x, params, *, block_b=2048, mxu_dtype=jnp.bfloat16):
    (g1, be1, m1, v1, W1, c1,
     g2, be2, m2, v2, W2, c2,
     g3, be3, m3, v3, W3, c3) = params

    comps = x.shape[1]
    classes = W3.shape[1]

    # Fold each BatchNorm into the Linear that immediately follows it.
    W1f, c1f = fold_bn_into_linear(g1, be1, m1, v1, W1, c1)
    W2f, c2f = fold_bn_into_linear(g2, be2, m2, v2, W2, c2)
    W3f, c3f = fold_bn_into_linear(g3, be3, m3, v3, W3, c3)

    # Zero-pad hidden widths (50, 70) to the 128-lane width; padded units stay
    # exactly zero (zero weights + zero bias + relu) so logits are unchanged.
    # The 12-wide output and the K=16 contraction are left unpadded.
    H1 = _round_up(W1f.shape[1], 128)
    H2 = _round_up(W2f.shape[1], 128)
    W1p = _pad2d(W1f, comps, H1).astype(mxu_dtype)
    W2p = _pad2d(W2f, H1, H2).astype(mxu_dtype)
    W3p = _pad2d(W3f, H2, classes).astype(jnp.float32)   # last layer in f32
    c1p = _pad1d(c1f, H1)[None, :].astype(jnp.float32)
    c2p = _pad1d(c2f, H2)[None, :].astype(jnp.float32)
    c3p = c3f[None, :].astype(jnp.float32)

    # Batch tiling: no wrapper-side padding of x (Pallas masks the partial
    # tail block).  Choose the tile to minimize tail waste, keep >= 2 balanced
    # tiles when possible (so v7x's two TensorCores both get work), and force
    # a 16-row multiple for sublane-safe block shapes.
    B = x.shape[0]
    num_tiles = max(1, pl.cdiv(B, block_b))
    if B >= 32:
        num_tiles = max(2, num_tiles)
        num_tiles += num_tiles % 2          # even tile count for v7x balance
    tile = _round_up(pl.cdiv(B, num_tiles), 16)
    grid = pl.cdiv(B, tile)

    x = x.astype(jnp.float32)               # kernel casts to mxu_dtype itself

    def resident(a):
        # Whole-array block, same block index every grid step -> stays in VMEM.
        return pl.BlockSpec(a.shape, lambda i: (0, 0))

    out = pl.pallas_call(
        avila_kernel,
        out_shape=jax.ShapeDtypeStruct((B, classes), jnp.float32),
        grid=(grid,),
        in_specs=[
            pl.BlockSpec((tile, comps), lambda i: (i, 0)),
            resident(W1p), resident(c1p),
            resident(W2p), resident(c2p),
            resident(W3p), resident(c3p),
        ],
        out_specs=pl.BlockSpec((tile, classes), lambda i: (i, 0)),
        compiler_params=pltpu.CompilerParams(
            dimension_semantics=("parallel",)),
    )(x, W1p, c1p, W2p, c2p, W3p, c3p)

    return out


# --------------------------------------------------------------------------- #
# Deterministic synthetic parameters + pure-JAX reference.
# --------------------------------------------------------------------------- #
def make_params(key, comps, classes):
    """Synthetic parameters matching AvilaNNModelV2 shapes (W stored (in,out))."""
    ks = jax.random.split(key, 12)

    def linear(kw, kb, fan_in, fan_out):
        bound = 1.0 / jnp.sqrt(fan_in)
        W = jax.random.uniform(kw, (fan_in, fan_out), jnp.float32, -bound, bound)
        b = jax.random.uniform(kb, (fan_out,), jnp.float32, -bound, bound)
        return W, b

    def bn(kg, kb, km, kv, feat):
        gamma = 1.0 + 0.1 * jax.random.normal(kg, (feat,), jnp.float32)
        beta = 0.1 * jax.random.normal(kb, (feat,), jnp.float32)
        mean = 0.1 * jax.random.normal(km, (feat,), jnp.float32)
        var = 1.0 + 0.05 * jax.random.uniform(kv, (feat,), jnp.float32)
        return gamma, beta, mean, var

    g1, be1, m1, v1 = bn(ks[0], ks[1], ks[2], ks[3], comps)
    W1, c1 = linear(ks[4], ks[5], comps, 50)
    g2, be2, m2, v2 = bn(ks[6], ks[7], ks[8], ks[9], 50)
    W2, c2 = linear(ks[10], ks[11], 50, 70)
    k2 = jax.random.split(jax.random.fold_in(key, 1), 6)
    g3, be3, m3, v3 = bn(k2[0], k2[1], k2[2], k2[3], 70)
    W3, c3 = linear(k2[4], k2[5], 70, classes)

    return (g1, be1, m1, v1, W1, c1,
            g2, be2, m2, v2, W2, c2,
            g3, be3, m3, v3, W3, c3)


def reference_forward(x, params):
    """Pure-JAX eval-mode reference (no folding, no padding)."""
    (g1, be1, m1, v1, W1, c1,
     g2, be2, m2, v2, W2, c2,
     g3, be3, m3, v3, W3, c3) = params
    eps = 1e-5
    h = (x - m1) / jnp.sqrt(v1 + eps) * g1 + be1
    h = jnp.maximum(h @ W1 + c1, 0.0)
    h = (h - m2) / jnp.sqrt(v2 + eps) * g2 + be2
    h = jnp.maximum(h @ W2 + c2, 0.0)
    h = (h - m3) / jnp.sqrt(v3 + eps) * g3 + be3
    return h @ W3 + c3


if __name__ == "__main__":
    comps, classes = 16, 12
    key = jax.random.PRNGKey(0)
    kx, kp = jax.random.split(key)
    params = make_params(kp, comps, classes)

    # batch=8  -> single partial tile (grid=1, masked tail)
    # batch=300 -> two balanced 160-row tiles (grid=2, v7x both-core path)
    for batch in (8, 300):
        x = jax.random.normal(jax.random.fold_in(kx, batch),
                              (batch, comps), jnp.float32)
        ref = reference_forward(x, params)

        # f32 MXU path: tight check of BN-fold / lane-pad / tiling plumbing.
        out_f32 = avila_forward(x, params, mxu_dtype=jnp.float32)
        jax.block_until_ready(out_f32)
        assert out_f32.shape == (batch, classes)
        assert jnp.allclose(out_f32, ref, atol=1e-4, rtol=1e-4)

        # bf16 MXU path (default fast path); last layer stays f32.
        out_bf16 = avila_forward(x, params)
        jax.block_until_ready(out_bf16)
        assert out_bf16.shape == (batch, classes)
        assert jnp.allclose(out_bf16, ref, atol=5e-2, rtol=5e-2)

    print("KERNEL_OK")
</pallas_src>

<mosaic_0001>
module attributes {stable_mosaic.version = 11 : i64} {
  func.func @avila_kernel(%arg0: i32, %arg1: memref<16x16xf32, #tpu.memory_space<vmem>>, %arg2: memref<16x128xf32, #tpu.memory_space<vmem>>, %arg3: memref<1x128xf32, #tpu.memory_space<vmem>>, %arg4: memref<128x128xf32, #tpu.memory_space<vmem>>, %arg5: memref<1x128xf32, #tpu.memory_space<vmem>>, %arg6: memref<128x12xf32, #tpu.memory_space<vmem>>, %arg7: memref<1x12xf32, #tpu.memory_space<vmem>>, %arg8: memref<16x12xf32, #tpu.memory_space<vmem>>) attributes {dimension_semantics = [#tpu.dimension_semantics<parallel>], iteration_bounds = array<i64: 1>, scalar_prefetch = 0 : i64, scratch_operands = 0 : i64, tpu.core_type = #tpu.core_type<tc>, window_params = [{transform_indices = @transform_0, window_bounds = array<i64: 16, 16>}, {pipeline_mode = #tpu.pipeline_mode<synchronous>, transform_indices = @transform_1, window_bounds = array<i64: 16, 128>}, {pipeline_mode = #tpu.pipeline_mode<synchronous>, transform_indices = @transform_2, window_bounds = array<i64: 1, 128>}, {pipeline_mode = #tpu.pipeline_mode<synchronous>, transform_indices = @transform_3, window_bounds = array<i64: 128, 128>}, {pipeline_mode = #tpu.pipeline_mode<synchronous>, transform_indices = @transform_4, window_bounds = array<i64: 1, 128>}, {pipeline_mode = #tpu.pipeline_mode<synchronous>, transform_indices = @transform_5, window_bounds = array<i64: 128, 12>}, {pipeline_mode = #tpu.pipeline_mode<synchronous>, transform_indices = @transform_6, window_bounds = array<i64: 1, 12>}, {transform_indices = @transform_7, window_bounds = array<i64: 16, 12>}]} {
    %c0 = arith.constant 0 : index
    %c0_0 = arith.constant 0 : index
    %0 = vector.load %arg1[%c0, %c0_0] : memref<16x16xf32, #tpu.memory_space<vmem>>, vector<16x16xf32>
    %c0_1 = arith.constant 0 : index
    %c0_2 = arith.constant 0 : index
    %1 = vector.load %arg2[%c0_1, %c0_2] : memref<16x128xf32, #tpu.memory_space<vmem>>, vector<16x128xf32>
    %cst = arith.constant dense<0.000000e+00> : vector<16x128xf32>
    %2 = tpu.matmul %0, %1, %cst {dimension_numbers = #tpu.dot_dimension_numbers<[1], [0], [0], [1], [0, 0, 1, 1], [], []>} : vector<16x16xf32>, vector<16x128xf32>, vector<16x128xf32> -> vector<16x128xf32>
    %c0_3 = arith.constant 0 : index
    %c0_4 = arith.constant 0 : index
    %3 = vector.load %arg3[%c0_3, %c0_4] : memref<1x128xf32, #tpu.memory_space<vmem>>, vector<1x128xf32>
    %4 = vector.broadcast %3 : vector<1x128xf32> to vector<16x128xf32>
    %5 = arith.addf %2, %4 : vector<16x128xf32>
    %cst_5 = arith.constant 0.000000e+00 : f32
    %6 = vector.broadcast %cst_5 : f32 to vector<16x128xf32>
    %7 = arith.maximumf %5, %6 : vector<16x128xf32>
    %c0_6 = arith.constant 0 : index
    %c0_7 = arith.constant 0 : index
    %8 = vector.load %arg4[%c0_6, %c0_7] : memref<128x128xf32, #tpu.memory_space<vmem>>, vector<128x128xf32>
    %cst_8 = arith.constant dense<0.000000e+00> : vector<16x128xf32>
    %9 = tpu.matmul %7, %8, %cst_8 {dimension_numbers = #tpu.dot_dimension_numbers<[1], [0], [0], [1], [0, 0, 1, 1], [], []>} : vector<16x128xf32>, vector<128x128xf32>, vector<16x128xf32> -> vector<16x128xf32>
    %c0_9 = arith.constant 0 : index
    %c0_10 = arith.constant 0 : index
    %10 = vector.load %arg5[%c0_9, %c0_10] : memref<1x128xf32, #tpu.memory_space<vmem>>, vector<1x128xf32>
    %11 = vector.broadcast %10 : vector<1x128xf32> to vector<16x128xf32>
    %12 = arith.addf %9, %11 : vector<16x128xf32>
    %cst_11 = arith.constant 0.000000e+00 : f32
    %13 = vector.broadcast %cst_11 : f32 to vector<16x128xf32>
    %14 = arith.maximumf %12, %13 : vector<16x128xf32>
    %c0_12 = arith.constant 0 : index
    %c0_13 = arith.constant 0 : index
    %15 = vector.load %arg6[%c0_12, %c0_13] : memref<128x12xf32, #tpu.memory_space<vmem>>, vector<128x12xf32>
    %cst_14 = arith.constant dense<0.000000e+00> : vector<16x12xf32>
    %16 = tpu.matmul %14, %15, %cst_14 {dimension_numbers = #tpu.dot_dimension_numbers<[1], [0], [0], [1], [0, 0, 1, 1], [], []>} : vector<16x128xf32>, vector<128x12xf32>, vector<16x12xf32> -> vector<16x12xf32>
    %c0_15 = arith.constant 0 : index
    %c0_16 = arith.constant 0 : index
    %17 = vector.load %arg7[%c0_15, %c0_16] : memref<1x12xf32, #tpu.memory_space<vmem>>, vector<1x12xf32>
    %18 = vector.broadcast %17 : vector<1x12xf32> to vector<16x12xf32>
    %19 = arith.addf %16, %18 : vector<16x12xf32>
    %c0_17 = arith.constant 0 : index
    %c0_18 = arith.constant 0 : index
    %20 = vector.load %arg8[%c0_17, %c0_18] : memref<16x12xf32, #tpu.memory_space<vmem>>, vector<16x12xf32>
    tpu.vector_store %arg8[%c0_17, %c0_18], %19 {strides = array<i32>} : memref<16x12xf32, #tpu.memory_space<vmem>>, vector<16x12xf32>,
    return
  }
  func.func @transform_0(%arg0: i32) -> (i32, i32) {
    %c0_i32 = arith.constant 0 : i32
    %c0_i32_0 = arith.constant 0 : i32
    return %arg0, %c0_i32 : i32, i32
  }
  func.func @transform_1(%arg0: i32) -> (i32, i32) {
    %c0_i32 = arith.constant 0 : i32
    %c0_i32_0 = arith.constant 0 : i32
    %c0_i32_1 = arith.constant 0 : i32
    return %c0_i32, %c0_i32_0 : i32, i32
  }
  func.func @transform_2(%arg0: i32) -> (i32, i32) {
    %c0_i32 = arith.constant 0 : i32
    %c0_i32_0 = arith.constant 0 : i32
    %c0_i32_1 = arith.constant 0 : i32
    return %c0_i32, %c0_i32_0 : i32, i32
  }
  func.func @transform_3(%arg0: i32) -> (i32, i32) {
    %c0_i32 = arith.constant 0 : i32
    %c0_i32_0 = arith.constant 0 : i32
    %c0_i32_1 = arith.constant 0 : i32
    return %c0_i32, %c0_i32_0 : i32, i32
  }
  func.func @transform_4(%arg0: i32) -> (i32, i32) {
    %c0_i32 = arith.constant 0 : i32
    %c0_i32_0 = arith.constant 0 : i32
    %c0_i32_1 = arith.constant 0 : i32
    return %c0_i32, %c0_i32_0 : i32, i32
  }
  func.func @transform_5(%arg0: i32) -> (i32, i32) {
    %c0_i32 = arith.constant 0 : i32
    %c0_i32_0 = arith.constant 0 : i32
    %c0_i32_1 = arith.constant 0 : i32
    return %c0_i32, %c0_i32_0 : i32, i32
  }
  func.func @transform_6(%arg0: i32) -> (i32, i32) {
    %c0_i32 = arith.constant 0 : i32
    %c0_i32_0 = arith.constant 0 : i32
    %c0_i32_1 = arith.constant 0 : i32
    return %c0_i32, %c0_i32_0 : i32, i32
  }
  func.func @transform_7(%arg0: i32) -> (i32, i32) {
    %c0_i32 = arith.constant 0 : i32
    %c0_i32_0 = arith.constant 0 : i32
    return %arg0, %c0_i32 : i32, i32
  }
}

</mosaic_0001>

<llo_original>
// kernel: tpu_custom_call.1
$region0: #{tpu_custom_call.1}
  #allocation0 [shape = 'u32[]', space=smem, size = 0x4, offset = 0x4, fixed_abs, tag = 'smem constant byte address 0x4 - core index']
  #allocation1 [shape = 'u32[144,128]{1,0:T(1,128)}', space=vmem, size = 0x12000, scoped, tag = 'internal scratch']
  %s0 = inlined_call_operand.hbm [shape: f32[8,16], index: 0, kind: input, shape index: {}]
  %s1 = inlined_call_operand.vmem [shape: f32[16,128], index: 1, kind: input, shape index: {}]
  %s2 = inlined_call_operand.vmem [shape: f32[1,128], index: 2, kind: input, shape index: {}]
  %s3 = inlined_call_operand.vmem [shape: f32[128,128], index: 3, kind: input, shape index: {}]
  %s4 = inlined_call_operand.vmem [shape: f32[1,128], index: 4, kind: input, shape index: {}]
  %s5 = inlined_call_operand.vmem [shape: f32[128,12], index: 5, kind: input, shape index: {}]
  %s6 = inlined_call_operand.vmem [shape: f32[1,12], index: 6, kind: input, shape index: {}]
  %s7 = inlined_call_operand.hbm [shape: f32[8,12], index: 7, kind: output, shape index: {}]
  %s8 = sld [smem:[#allocation0]]
  $region42: #{tpu_custom_call.1} parent=0
    _
  %s10 = ssub.s32 1, %s8
  %s11 = scalar_select 0, %s10, %s8
  $region1: #{tpu_custom_call.1} parent=0
    #allocation2 [shape = 'u8[8192]{0}', space=vmem, size = 0x2000, scoped, tag = 'input window, operand 0, single buffered']
    #allocation3 [shape = 's32[1]{0}', space=sflag, size = 0x4, scoped, tag = 'scoped memory for tpu_custom_call.1']
    #allocation4 [shape = 's32[1]{0}', space=sflag, size = 0x4, scoped, tag = 'scoped memory for tpu_custom_call.1']
    #allocation5 [shape = 'u8[8192]{0}', space=vmem, size = 0x2000, scoped, tag = 'output window, operand 0, single buffered']
    %12 = vsyncpa [#allocation3], 0
    %13 = vsyncpa [#allocation4], 0
    // Predicated region
    $region2: #{tpu_custom_call.1} parent=1 // pred_check
      _
    $region3: #{tpu_custom_call.1} parent=1 // pred_check_branch
      %15 = sbr.rel (0) target = $region5
    $region4: #{tpu_custom_call.1} parent=1 // pred_region
      %s17 = ssub.s32 256, 128
      %18 = vsyncadd [#allocation3], %s17
      %s19 = sshll.u32 [#allocation2], 4
      %s20 = int_to_ptr.vmem [resolvable:$true] %s19
      %25 = dma.hbm_to_vmem [thread:$0]  %s0, 128, %s20, [#allocation3], 128, 128, 8
    $region5: #{tpu_custom_call.1} parent=1 // pred_fallthru
      _
    // Predicated region
    $region6: #{tpu_custom_call.1} parent=1 // pred_check
      _
    $region7: #{tpu_custom_call.1} parent=1 // pred_check_branch
      %27 = sbr.rel (0) target = $region9
    $region8: #{tpu_custom_call.1} parent=1 // pred_region
      _
    $region9: #{tpu_custom_call.1} parent=1 // pred_fallthru
      _
    // Predicated region
    $region10: #{tpu_custom_call.1} parent=1 // pred_check
      _
    $region11: #{tpu_custom_call.1} parent=1 // pred_check_branch
      %29 = sbr.rel (0) target = $region13
    $region12: #{tpu_custom_call.1} parent=1 // pred_region
      _
    $region13: #{tpu_custom_call.1} parent=1 // pred_fallthru
      _
    // Predicated region
    $region14: #{tpu_custom_call.1} parent=1 // pred_check
      _
    $region15: #{tpu_custom_call.1} parent=1 // pred_check_branch
      %31 = sbr.rel (0) target = $region17
    $region16: #{tpu_custom_call.1} parent=1 // pred_region
      _
    $region17: #{tpu_custom_call.1} parent=1 // pred_fallthru
      _
    // Predicated region
    $region18: #{tpu_custom_call.1} parent=1 // pred_check
      _
    $region19: #{tpu_custom_call.1} parent=1 // pred_check_branch
      %33 = sbr.rel (0) target = $region21
    $region20: #{tpu_custom_call.1} parent=1 // pred_region
      _
    $region21: #{tpu_custom_call.1} parent=1 // pred_fallthru
      _
    // Predicated region
    $region22: #{tpu_custom_call.1} parent=1 // pred_check
      _
    $region23: #{tpu_custom_call.1} parent=1 // pred_check_branch
      %35 = sbr.rel (0) target = $region25
    $region24: #{tpu_custom_call.1} parent=1 // pred_region
      _
    $region25: #{tpu_custom_call.1} parent=1 // pred_fallthru
      _
    // Predicated region
    $region26: #{tpu_custom_call.1} parent=1 // pred_check
      _
    $region27: #{tpu_custom_call.1} parent=1 // pred_check_branch
      %37 = sbr.rel (0) target = $region29
    $region28: #{tpu_custom_call.1} parent=1 // pred_region
      _
    $region29: #{tpu_custom_call.1} parent=1 // pred_fallthru
      _
    // Predicated region
    $region30: #{tpu_custom_call.1} parent=1 // pred_check
      _
    $region31: #{tpu_custom_call.1} parent=1 // pred_check_branch
      %39 = sbr.rel (0) target = $region33
    $region32: #{tpu_custom_call.1} parent=1 // pred_region
      %40 = dma.done [#allocation3], 256
    $region33: #{tpu_custom_call.1} parent=1 // pred_fallthru
      _
    %v41 = vld [vmem:[#allocation2] sm:$0xff]
    %v42 = vld [vmem:[#allocation2 + $0x8] sm:$0xff]
    %v43 = vld [vmem:[%s1] sm:$0xff]
    %v44 = vld [vmem:[%s1 + $0x8] sm:$0xff]
    %v45 = vld [vmem:[%s2] sm:$0x1]
    %v47 = vlaneseq
    %v48 = vshrl.u32 %v47, 7
    %v49 = vsub.s32 0, %v48
    %v50 = vrot.slane %v45, %v49
    %vm52 = vcmask 130048
    %v54 = vsel %vm52, %v41, 0
    %v57 = vsel %vm52, %v42, 0
    %59 = vmatprep.subr.mxu0 0.0
    %60 = vmatpush1.msra.mxu0 0.0
    %61 = vmatprep.subr.mxu0 0.0
    %62 = vmatpush1.msra.mxu0 0.0
    %63 = vmatprep.subr.mxu0 0.0
    %64 = vmatpush1.msra.mxu0 0.0
    %65 = vmatprep.subr.mxu0 0.0
    %66 = vmatpush1.msra.mxu0 0.0
    %67 = vmatprep.subr.mxu0 0.0
    %68 = vmatpush1.msra.mxu0 0.0
    %69 = vmatprep.subr.mxu0 0.0
    %70 = vmatpush1.msra.mxu0 0.0
    %71 = vmatprep.subr.mxu0 0.0
    %72 = vmatpush1.msra.mxu0 0.0
    %73 = vmatprep.subr.mxu0 0.0
    %74 = vmatpush1.msra.mxu0 0.0
    %75 = vmatprep.subr.mxu0 0.0
    %76 = vmatpush1.msra.mxu0 0.0
    %77 = vmatprep.subr.mxu0 0.0
    %78 = vmatpush1.msra.mxu0 0.0
    %79 = vmatprep.subr.mxu0 0.0
    %80 = vmatpush1.msra.mxu0 0.0
    %81 = vmatprep.subr.mxu0 0.0
    %82 = vmatpush1.msra.mxu0 0.0
    %83 = vmatprep.subr.mxu0 0.0
    %84 = vmatpush1.msra.mxu0 0.0
    %85 = vmatprep.subr.mxu0 0.0
    %86 = vmatpush1.msra.mxu0 0.0
    %87 = vmatprep.subr.mxu0 0.0
    %88 = vmatpush1.msra.mxu0 %v44
    %89 = vmatprep.subr.mxu0 0.0
    %90 = vmatpush1.msra.mxu0 %v43
    %91 = vmatprep.subr.mxu0 0.0
    %92 = vmatpush2.msra.mxu0 0.0
    %93 = vmatprep.subr.mxu0 0.0
    %94 = vmatpush2.msra.mxu0 0.0
    %95 = vmatprep.subr.mxu0 0.0
    %96 = vmatpush2.msra.mxu0 0.0
    %97 = vmatprep.subr.mxu0 0.0
    %98 = vmatpush2.msra.mxu0 0.0
    %99 = vmatprep.subr.mxu0 0.0
    %100 = vmatpush2.msra.mxu0 0.0
    %101 = vmatprep.subr.mxu0 0.0
    %102 = vmatpush2.msra.mxu0 0.0
    %103 = vmatprep.subr.mxu0 0.0
    %104 = vmatpush2.msra.mxu0 0.0
    %105 = vmatprep.subr.mxu0 0.0
    %106 = vmatpush2.msra.mxu0 0.0
    %107 = vmatprep.subr.mxu0 0.0
    %108 = vmatpush2.msra.mxu0 0.0
    %109 = vmatprep.subr.mxu0 0.0
    %110 = vmatpush2.msra.mxu0 0.0
    %111 = vmatprep.subr.mxu0 0.0
    %112 = vmatpush2.msra.mxu0 0.0
    %113 = vmatprep.subr.mxu0 0.0
    %114 = vmatpush2.msra.mxu0 0.0
    %115 = vmatprep.subr.mxu0 0.0
    %116 = vmatpush2.msra.mxu0 0.0
    %117 = vmatprep.subr.mxu0 0.0
    %118 = vmatpush2.msra.mxu0 0.0
    %119 = vmatprep.subr.mxu0 0.0
    %120 = vmatpush2.msra.mxu0 0.0
    %121 = vmatprep.subr.mxu0 0.0
    %122 = vmatpush2.msra.mxu0 0.0
    %123 = vmatprep.mubr.f32.mxu0 0.0
    %124 = vmatmul.mubr.f32.gmra.mxu0 %v54
    %v125 = vpop.f32.mrf.mxu0
    %v126 = vadd.f32 %v50, %v125
    %v127 = vpop.f32.mrf.mxu0
    %128 = vmatprep.mubr.f32.mxu0 0.0
    %129 = vmatmul.mubr.f32.gmra.mxu0 %v57
    %v130 = vpop.f32.mrf.mxu0
    %v131 = vadd.f32 %v50, %v130
    %v132 = vpop.f32.mrf.mxu0
    %133 = vdwg.mxu0
    %v134 = vmax.f32 %v126, 0.0
    %v135 = vmax.f32 %v131, 0.0
    %v136 = vld [vmem:[%s3] sm:$0xff]
    %v137 = vld [vmem:[%s3 + $0x8] sm:$0xff]
    %v138 = vld [vmem:[%s3 + $0x10] sm:$0xff]
    %v139 = vld [vmem:[%s3 + $0x18] sm:$0xff]
    %v140 = vld [vmem:[%s3 + $0x20] sm:$0xff]
    %v141 = vld [vmem:[%s3 + $0x28] sm:$0xff]
    %v142 = vld [vmem:[%s3 + $0x30] sm:$0xff]
    %v143 = vld [vmem:[%s3 + $0x38] sm:$0xff]
    %v144 = vld [vmem:[%s3 + $0x40] sm:$0xff]
    %v145 = vld [vmem:[%s3 + $0x48] sm:$0xff]
    %v146 = vld [vmem:[%s3 + $0x50] sm:$0xff]
    %v147 = vld [vmem:[%s3 + $0x58] sm:$0xff]
    %v148 = vld [vmem:[%s3 + $0x60] sm:$0xff]
    %v149 = vld [vmem:[%s3 + $0x68] sm:$0xff]
    %v150 = vld [vmem:[%s3 + $0x70] sm:$0xff]
    %v151 = vld [vmem:[%s3 + $0x78] sm:$0xff]
    %v152 = vld [vmem:[%s4] sm:$0x1]
    %v154 = vlaneseq
    %v155 = vshrl.u32 %v154, 7
    %v156 = vsub.s32 0, %v155
    %v157 = vrot.slane %v152, %v156
    %159 = vmatprep.subr.mxu0 0.0
    %160 = vmatpush1.msra.mxu0 %v151
    %161 = vmatprep.subr.mxu0 0.0
    %162 = vmatpush1.msra.mxu0 %v150
    %163 = vmatprep.subr.mxu0 0.0
    %164 = vmatpush1.msra.mxu0 %v149
    %165 = vmatprep.subr.mxu0 0.0
    %166 = vmatpush1.msra.mxu0 %v148
    %167 = vmatprep.subr.mxu0 0.0
    %168 = vmatpush1.msra.mxu0 %v147
    %169 = vmatprep.subr.mxu0 0.0
    %170 = vmatpush1.msra.mxu0 %v146
    %171 = vmatprep.subr.mxu0 0.0
    %172 = vmatpush1.msra.mxu0 %v145
    %173 = vmatprep.subr.mxu0 0.0
    %174 = vmatpush1.msra.mxu0 %v144
    %175 = vmatprep.subr.mxu0 0.0
    %176 = vmatpush1.msra.mxu0 %v143
    %177 = vmatprep.subr.mxu0 0.0
    %178 = vmatpush1.msra.mxu0 %v142
    %179 = vmatprep.subr.mxu0 0.0
    %180 = vmatpush1.msra.mxu0 %v141
    %181 = vmatprep.subr.mxu0 0.0
    %182 = vmatpush1.msra.mxu0 %v140
    %183 = vmatprep.subr.mxu0 0.0
    %184 = vmatpush1.msra.mxu0 %v139
    %185 = vmatprep.subr.mxu0 0.0
    %186 = vmatpush1.msra.mxu0 %v138
    %187 = vmatprep.subr.mxu0 0.0
    %188 = vmatpush1.msra.mxu0 %v137
    %189 = vmatprep.subr.mxu0 0.0
    %190 = vmatpush1.msra.mxu0 %v136
    %191 = vmatprep.subr.mxu0 0.0
    %192 = vmatpush2.msra.mxu0 0.0
    %193 = vmatprep.subr.mxu0 0.0
    %194 = vmatpush2.msra.mxu0 0.0
    %195 = vmatprep.subr.mxu0 0.0
    %196 = vmatpush2.msra.mxu0 0.0
    %197 = vmatprep.subr.mxu0 0.0
    %198 = vmatpush2.msra.mxu0 0.0
    %199 = vmatprep.subr.mxu0 0.0
    %200 = vmatpush2.msra.mxu0 0.0
    %201 = vmatprep.subr.mxu0 0.0
    %202 = vmatpush2.msra.mxu0 0.0
    %203 = vmatprep.subr.mxu0 0.0
    %204 = vmatpush2.msra.mxu0 0.0
    %205 = vmatprep.subr.mxu0 0.0
    %206 = vmatpush2.msra.mxu0 0.0
    %207 = vmatprep.subr.mxu0 0.0
    %208 = vmatpush2.msra.mxu0 0.0
    %209 = vmatprep.subr.mxu0 0.0
    %210 = vmatpush2.msra.mxu0 0.0
    %211 = vmatprep.subr.mxu0 0.0
    %212 = vmatpush2.msra.mxu0 0.0
    %213 = vmatprep.subr.mxu0 0.0
    %214 = vmatpush2.msra.mxu0 0.0
    %215 = vmatprep.subr.mxu0 0.0
    %216 = vmatpush2.msra.mxu0 0.0
    %217 = vmatprep.subr.mxu0 0.0
    %218 = vmatpush2.msra.mxu0 0.0
    %219 = vmatprep.subr.mxu0 0.0
    %220 = vmatpush2.msra.mxu0 0.0
    %221 = vmatprep.subr.mxu0 0.0
    %222 = vmatpush2.msra.mxu0 0.0
    %223 = vmatprep.mubr.f32.mxu0 0.0
    %224 = vmatmul.mubr.f32.gmra.mxu0 %v134
    %v225 = vpop.f32.mrf.mxu0
    %v226 = vadd.f32 %v157, %v225
    %v227 = vpop.f32.mrf.mxu0
    %228 = vmatprep.mubr.f32.mxu0 0.0
    %229 = vmatmul.mubr.f32.gmra.mxu0 %v135
    %v230 = vpop.f32.mrf.mxu0
    %v231 = vadd.f32 %v157, %v230
    %v232 = vpop.f32.mrf.mxu0
    %233 = vdwg.mxu0
    %v234 = vmax.f32 %v226, 0.0
    %v235 = vmax.f32 %v231, 0.0
    %v236 = vld [vmem:[%s5] sm:$0xff]
    %v237 = vld [vmem:[%s5 + $0x8] sm:$0xff]
    %v238 = vld [vmem:[%s5 + $0x10] sm:$0xff]
    %v239 = vld [vmem:[%s5 + $0x18] sm:$0xff]
    %v240 = vld [vmem:[%s5 + $0x20] sm:$0xff]
    %v241 = vld [vmem:[%s5 + $0x28] sm:$0xff]
    %v242 = vld [vmem:[%s5 + $0x30] sm:$0xff]
    %v243 = vld [vmem:[%s5 + $0x38] sm:$0xff]
    %v244 = vld [vmem:[%s5 + $0x40] sm:$0xff]
    %v245 = vld [vmem:[%s5 + $0x48] sm:$0xff]
    %v246 = vld [vmem:[%s5 + $0x50] sm:$0xff]
    %v247 = vld [vmem:[%s5 + $0x58] sm:$0xff]
    %v248 = vld [vmem:[%s5 + $0x60] sm:$0xff]
    %v249 = vld [vmem:[%s5 + $0x68] sm:$0xff]
    %v250 = vld [vmem:[%s5 + $0x70] sm:$0xff]
    %v251 = vld [vmem:[%s5 + $0x78] sm:$0xff]
    %v252 = vld [vmem:[%s6] sm:$0x1]
    %v254 = vlaneseq
    %v255 = vshrl.u32 %v254, 7
    %v256 = vsub.s32 0, %v255
    %v257 = vrot.slane %v252, %v256
    %259 = vmatprep.subr.mxu0 0.0
    %260 = vmatpush1.msra.mxu0 %v251
    %261 = vmatprep.subr.mxu0 0.0
    %262 = vmatpush1.msra.mxu0 %v250
    %263 = vmatprep.subr.mxu0 0.0
    %264 = vmatpush1.msra.mxu0 %v249
    %265 = vmatprep.subr.mxu0 0.0
    %266 = vmatpush1.msra.mxu0 %v248
    %267 = vmatprep.subr.mxu0 0.0
    %268 = vmatpush1.msra.mxu0 %v247
    %269 = vmatprep.subr.mxu0 0.0
    %270 = vmatpush1.msra.mxu0 %v246
    %271 = vmatprep.subr.mxu0 0.0
    %272 = vmatpush1.msra.mxu0 %v245
    %273 = vmatprep.subr.mxu0 0.0
    %274 = vmatpush1.msra.mxu0 %v244
    %275 = vmatprep.subr.mxu0 0.0
    %276 = vmatpush1.msra.mxu0 %v243
    %277 = vmatprep.subr.mxu0 0.0
    %278 = vmatpush1.msra.mxu0 %v242
    %279 = vmatprep.subr.mxu0 0.0
    %280 = vmatpush1.msra.mxu0 %v241
    %281 = vmatprep.subr.mxu0 0.0
    %282 = vmatpush1.msra.mxu0 %v240
    %283 = vmatprep.subr.mxu0 0.0
    %284 = vmatpush1.msra.mxu0 %v239
    %285 = vmatprep.subr.mxu0 0.0
    %286 = vmatpush1.msra.mxu0 %v238
    %287 = vmatprep.subr.mxu0 0.0
    %288 = vmatpush1.msra.mxu0 %v237
    %289 = vmatprep.subr.mxu0 0.0
    %290 = vmatpush1.msra.mxu0 %v236
    %291 = vmatprep.subr.mxu0 0.0
    %292 = vmatpush2.msra.mxu0 0.0
    %293 = vmatprep.subr.mxu0 0.0
    %294 = vmatpush2.msra.mxu0 0.0
    %295 = vmatprep.subr.mxu0 0.0
    %296 = vmatpush2.msra.mxu0 0.0
    %297 = vmatprep.subr.mxu0 0.0
    %298 = vmatpush2.msra.mxu0 0.0
    %299 = vmatprep.subr.mxu0 0.0
    %300 = vmatpush2.msra.mxu0 0.0
    %301 = vmatprep.subr.mxu0 0.0
    %302 = vmatpush2.msra.mxu0 0.0
    %303 = vmatprep.subr.mxu0 0.0
    %304 = vmatpush2.msra.mxu0 0.0
    %305 = vmatprep.subr.mxu0 0.0
    %306 = vmatpush2.msra.mxu0 0.0
    %307 = vmatprep.subr.mxu0 0.0
    %308 = vmatpush2.msra.mxu0 0.0
    %309 = vmatprep.subr.mxu0 0.0
    %310 = vmatpush2.msra.mxu0 0.0
    %311 = vmatprep.subr.mxu0 0.0
    %312 = vmatpush2.msra.mxu0 0.0
    %313 = vmatprep.subr.mxu0 0.0
    %314 = vmatpush2.msra.mxu0 0.0
    %315 = vmatprep.subr.mxu0 0.0
    %316 = vmatpush2.msra.mxu0 0.0
    %317 = vmatprep.subr.mxu0 0.0
    %318 = vmatpush2.msra.mxu0 0.0
    %319 = vmatprep.subr.mxu0 0.0
    %320 = vmatpush2.msra.mxu0 0.0
    %321 = vmatprep.subr.mxu0 0.0
    %322 = vmatpush2.msra.mxu0 0.0
    %323 = vmatprep.mubr.f32.mxu0 0.0
    %324 = vmatmul.mubr.f32.gmra.mxu0 %v234
    %v325 = vpop.f32.mrf.mxu0
    %v326 = vadd.f32 %v257, %v325
    %v327 = vpop.f32.mrf.mxu0
    %328 = vmatprep.mubr.f32.mxu0 0.0
    %329 = vmatmul.mubr.f32.gmra.mxu0 %v235
    %v330 = vpop.f32.mrf.mxu0
    %v331 = vadd.f32 %v257, %v330
    %v332 = vpop.f32.mrf.mxu0
    %333 = vdwg.mxu0
    %vm334 = vcmask 97280
    %335 = vst.msk [vmem:[#allocation5] sm:$0xff] %vm334, %v326
    %336 = vst.msk [vmem:[#allocation5 + $0x8] sm:$0xff] %vm334, %v331
    // Predicated region
    $region34: #{tpu_custom_call.1} parent=1 // pred_check
      _
    $region35: #{tpu_custom_call.1} parent=1 // pred_check_branch
      %338 = sbr.rel (0) target = $region37
    $region36: #{tpu_custom_call.1} parent=1 // pred_region
      %s340 = ssub.s32 256, 128
      %341 = vsyncadd [#allocation4], %s340
      %s342 = sshll.u32 [#allocation5], 4
      %s343 = int_to_ptr.vmem [resolvable:$true] %s342
      %348 = dma.vmem_to_hbm [thread:$0]  %s343, 128, %s7, [#allocation4], 128, 128, 8
    $region37: #{tpu_custom_call.1} parent=1 // pred_fallthru
      _
    // Predicated region
    $region38: #{tpu_custom_call.1} parent=1 // pred_check
      _
    $region39: #{tpu_custom_call.1} parent=1 // pred_check_branch
      %350 = sbr.rel (0) target = $region41
    $region40: #{tpu_custom_call.1} parent=1 // pred_region
      %351 = dma.done [#allocation4], 256
    $region41: #{tpu_custom_call.1} parent=1 // pred_fallthru
      _
    %352 = vsyncpa [#allocation3], 1
    %353 = vsyncpa [#allocation4], 1

</llo_original>
